<compile_context>
chip_gen: v7x
topology: tpu7x:2x2x1
jax: 0.10.0
libtpu: 0.0.40
codegen_flags: <defaults>
</compile_context>

<pallas_src>
import jax
import jax.numpy as jnp
from jax.experimental import pallas as pl
from jax.experimental.pallas import tpu as pltpu


def meanpool_fc_kernel(vt_ref, x_ref, mask_ref, w_ref, b_ref, o_ref,
                       sum_acc, cnt_acc):
    # vt_ref   : [n_batch_tiles] i32 (SMEM, scalar-prefetched)  valid seq tiles per batch tile
    # x_ref    : [TB, TS, H]  native dtype (f32/bf16)           last_hidden_state tile
    # mask_ref : [TB, TS]     f32 (zero-padded seq tail)        attention_mask tile
    # w_ref    : [H, OUT]     f32                               fc weight (transposed)
    # b_ref    : [1, OUT]     f32                               fc bias
    # o_ref    : [TB, OUT]    f32                               logits (resident over seq axis)
    # sum_acc  : [TB, H]      f32 scratch                       running masked sum
    # cnt_acc  : [TB, 1]      f32 scratch                       running mask count
    bi = pl.program_id(0)
    sj = pl.program_id(1)

    @pl.when(sj == 0)
    def _init():
        sum_acc[...] = jnp.zeros_like(sum_acc)
        cnt_acc[...] = jnp.zeros_like(cnt_acc)

    # Skip compute on seq tiles past the last valid one for this batch tile
    # (their DMA is already skipped via the clamped index_map).
    @pl.when(sj < vt_ref[bi])
    def _accumulate():
        m = mask_ref[...]                              # [TB, TS] f32
        m3 = m[:, :, None]                             # [TB, TS, 1]
        # Upcast before VPU math (v5e has no bf16 VALU); accumulate in f32.
        x32 = x_ref[...].astype(jnp.float32)           # [TB, TS, H]
        # Select (not multiply) where mask == 0 so unspecified edge-block
        # values (ragged S tail of the unpadded x) can never produce NaN.
        contrib = jnp.where(m3 != 0.0, x32 * m3, 0.0)  # [TB, TS, H]
        sum_acc[...] += jnp.sum(contrib, axis=1)       # [TB, H]
        cnt_acc[...] += jnp.sum(m, axis=1, keepdims=True)

    @pl.when(sj == pl.num_programs(1) - 1)
    def _finalize():
        denom = jnp.maximum(cnt_acc[...], 1e-9)        # torch.clamp(min=1e-9)
        mean = sum_acc[...] / denom                    # [TB, H] f32
        logits = jnp.dot(mean, w_ref[...],
                         preferred_element_type=jnp.float32) + b_ref[...]
        o_ref[...] = logits.astype(o_ref.dtype)


def custom_model_forward(last_hidden_state, attention_mask, fc_weight, fc_bias,
                         *, tile_b=None, tile_s=512):
    """last_hidden_state: [B,S,H] (f32 or bf16 — streamed as-is, never padded),
    attention_mask: [B,S] (any numeric dtype), fc_weight: [OUT,H] (torch layout),
    fc_bias: [OUT]. Returns [B,OUT] f32 logits."""
    B, S, H = last_hidden_state.shape
    OUT = fc_weight.shape[0]

    # --- tile_b: a multiple-of-8 divisor of B, preferring >=2 batch tiles so
    #     v7x's two TensorCores both get work; fall back to full batch (a block
    #     equal to the full dim also satisfies the (8,128) rule).  No batch pad.
    if tile_b is None or B % tile_b != 0 or (tile_b % 8 != 0 and tile_b != B):
        tile_b = next((c for c in (8, 16, 32) if B % c == 0 and B // c >= 2), B)

    # --- tile_s: multiple of 128, no larger than ceil(S/128)*128.
    s_ceil128 = -(-S // 128) * 128
    tile_s = max(128, min(int(tile_s) // 128 * 128, s_ceil128))
    s_pad = -(-S // tile_s) * tile_s          # padding applied to the MASK ONLY
    n_bt = B // tile_b
    n_st = s_pad // tile_s

    # Small tensors prepared on the host side (x itself is untouched).
    mask_f32 = attention_mask.astype(jnp.float32)
    if s_pad != S:
        mask_f32 = jnp.pad(mask_f32, ((0, 0), (0, s_pad - S)))   # tiny [B,S] array
    w_t = jnp.transpose(fc_weight).astype(jnp.float32)           # [H, OUT]
    b = fc_bias.reshape(1, OUT).astype(jnp.float32)              # [1, OUT]

    # --- per-batch-tile count of seq tiles containing at least one valid token
    #     (scalar-prefetched; lets the kernel skip DMA+compute of padded tiles).
    pos1 = jnp.arange(S, dtype=jnp.int32) + 1
    last_valid = jnp.max(jnp.where(attention_mask != 0, pos1, 0), axis=1)   # [B]
    vt_row = (last_valid + tile_s - 1) // tile_s                            # [B]
    vt = jnp.max(vt_row.reshape(n_bt, tile_b), axis=1).astype(jnp.int32)    # [n_bt]

    def seq_block(j, vt_ref, i):
        # Clamp to the last valid block: repeated block index => Pallas skips re-DMA.
        return jnp.maximum(jnp.minimum(j, vt_ref[i] - 1), 0)

    grid_spec = pltpu.PrefetchScalarGridSpec(
        num_scalar_prefetch=1,
        grid=(n_bt, n_st),
        in_specs=[
            pl.BlockSpec((tile_b, tile_s, H),
                         lambda i, j, vt_ref: (i, seq_block(j, vt_ref, i), 0)),
            pl.BlockSpec((tile_b, tile_s),
                         lambda i, j, vt_ref: (i, seq_block(j, vt_ref, i))),
            pl.BlockSpec((H, OUT), lambda i, j, vt_ref: (0, 0)),   # fc weight (no re-DMA)
            pl.BlockSpec((1, OUT), lambda i, j, vt_ref: (0, 0)),   # fc bias   (no re-DMA)
        ],
        out_specs=pl.BlockSpec((tile_b, OUT), lambda i, j, vt_ref: (i, 0)),
        scratch_shapes=[
            pltpu.VMEM((tile_b, H), jnp.float32),   # masked-sum accumulator
            pltpu.VMEM((tile_b, 1), jnp.float32),   # mask-count accumulator
        ],
    )

    # Raise the scoped VMEM limit only as far as the double-buffered tiles need
    # (stay well below v7x's 64 MiB physical VMEM).
    itemsize = jnp.dtype(last_hidden_state.dtype).itemsize
    tile_bytes = tile_b * tile_s * (H * itemsize + 4)              # x + mask tiles
    fixed_bytes = (H * OUT + OUT + tile_b * (H + 1 + OUT)) * 4
    vmem_limit = int(min(max(32 << 20, 2 * (2 * tile_bytes + fixed_bytes)), 56 << 20))

    out = pl.pallas_call(
        meanpool_fc_kernel,
        out_shape=jax.ShapeDtypeStruct((B, OUT), jnp.float32),
        grid_spec=grid_spec,
        compiler_params=pltpu.CompilerParams(
            dimension_semantics=("parallel", "arbitrary"),
            vmem_limit_bytes=vmem_limit,
        ),
    )(vt, last_hidden_state, mask_f32, w_t, b)
    return out


def reference_forward(last_hidden_state, attention_mask, fc_weight, fc_bias):
    # pure-JAX reference mirroring the PyTorch code
    m = attention_mask.astype(jnp.float32)[..., None]
    s = jnp.sum(last_hidden_state.astype(jnp.float32) * m, axis=1)
    d = jnp.maximum(jnp.sum(m, axis=1), 1e-9)          # torch.clamp(min=1e-9)
    mean = s / d
    return mean @ fc_weight.T.astype(jnp.float32) + fc_bias.astype(jnp.float32)


if __name__ == "__main__":
    # Small shapes consistent with the module: batch=2, hidden=32, out=6.
    H, OUT = 32, 6
    initializer_range = 0.02  # typical AutoConfig.initializer_range

    key = jax.random.PRNGKey(0)
    k_x, k_w, k_x2 = jax.random.split(key, 3)

    # deterministic init matching _init_weights: N(0, initializer_range), zero bias
    fc_weight = initializer_range * jax.random.normal(k_w, (OUT, H), dtype=jnp.float32)
    fc_bias = jnp.zeros((OUT,), dtype=jnp.float32)

    def run_case(B, S, lengths, kx, tile_s):
        x = jax.random.normal(kx, (B, S, H), dtype=jnp.float32)
        mask = jnp.array([[1] * l + [0] * (S - l) for l in lengths], dtype=jnp.int32)
        out = custom_model_forward(x, mask, fc_weight, fc_bias, tile_s=tile_s)
        out = jax.block_until_ready(out)
        ref = reference_forward(x, mask, fc_weight, fc_bias)
        assert out.shape == (B, OUT)
        assert jnp.allclose(out, ref, atol=1e-5, rtol=1e-5), "mismatch vs reference"

    # 1) full 2-step seq reduction (both seq tiles contain valid tokens)
    run_case(2, 256, [256, 85], k_x, tile_s=128)
    # 2) trailing seq tile fully padded -> skipped via scalar-prefetch clamp + pl.when
    run_case(2, 256, [100, 85], k_x, tile_s=128)
    # 3) ragged S (not a tile multiple): x streamed unpadded, only the mask is padded
    run_case(2, 200, [200, 70], k_x2, tile_s=128)

    print("KERNEL_OK")
</pallas_src>

<mosaic_0001>
module attributes {stable_mosaic.version = 11 : i64} {
  func.func @meanpool_fc_kernel(%arg0: i32, %arg1: i32, %arg2: memref<1xi32, #tpu.memory_space<smem>>, %arg3: memref<2x128x32xf32, #tpu.memory_space<vmem>>, %arg4: memref<2x128xf32, #tpu.memory_space<vmem>>, %arg5: memref<32x6xf32, #tpu.memory_space<vmem>>, %arg6: memref<1x6xf32, #tpu.memory_space<vmem>>, %arg7: memref<2x6xf32, #tpu.memory_space<vmem>>, %arg8: memref<2x32xf32, #tpu.memory_space<vmem>>, %arg9: memref<2x1xf32, #tpu.memory_space<vmem>>) attributes {dimension_semantics = [#tpu.dimension_semantics<parallel>, #tpu.dimension_semantics<arbitrary>], iteration_bounds = array<i64: 1, 2>, scalar_prefetch = 1 : i64, scratch_operands = 2 : i64, tpu.core_type = #tpu.core_type<tc>, window_params = [{transform_indices = @transform_0, window_bounds = array<i64: 2, 128, 32>}, {transform_indices = @transform_1, window_bounds = array<i64: 2, 128>}, {pipeline_mode = #tpu.pipeline_mode<synchronous>, transform_indices = @transform_2, window_bounds = array<i64: 32, 6>}, {pipeline_mode = #tpu.pipeline_mode<synchronous>, transform_indices = @transform_3, window_bounds = array<i64: 1, 6>}, {transform_indices = @transform_4, window_bounds = array<i64: 2, 6>}]} {
    %c0_i32 = arith.constant 0 : i32
    %0 = arith.cmpi eq, %arg1, %c0_i32 : i32
    %1 = arith.extui %0 : i1 to i32
    %c0_i32_0 = arith.constant 0 : i32
    %2 = arith.cmpi ne, %1, %c0_i32_0 : i32
    scf.if %2 {
      %cst = arith.constant 0.000000e+00 : f32
      %11 = vector.broadcast %cst : f32 to vector<2x32xf32>
      %c0 = arith.constant 0 : index
      %c0_3 = arith.constant 0 : index
      %12 = vector.load %arg8[%c0, %c0_3] : memref<2x32xf32, #tpu.memory_space<vmem>>, vector<2x32xf32>
      tpu.vector_store %arg8[%c0, %c0_3], %11 {strides = array<i32>} : memref<2x32xf32, #tpu.memory_space<vmem>>, vector<2x32xf32>,
      %cst_4 = arith.constant 0.000000e+00 : f32
      %13 = vector.broadcast %cst_4 : f32 to vector<2x1xf32>
      %c0_5 = arith.constant 0 : index
      %c0_6 = arith.constant 0 : index
      %14 = vector.load %arg9[%c0_5, %c0_6] : memref<2x1xf32, #tpu.memory_space<vmem>>, vector<2x1xf32>
      tpu.vector_store %arg9[%c0_5, %c0_6], %13 {strides = array<i32>} : memref<2x1xf32, #tpu.memory_space<vmem>>, vector<2x1xf32>,
    } else {
    }
    %3 = arith.index_cast %arg0 : i32 to index
    %4 = memref.load %arg2[%3] : memref<1xi32, #tpu.memory_space<smem>>
    %5 = arith.cmpi slt, %arg1, %4 : i32
    %6 = arith.extui %5 : i1 to i32
    %c0_i32_1 = arith.constant 0 : i32
    %7 = arith.cmpi ne, %6, %c0_i32_1 : i32
    scf.if %7 {
      %c0 = arith.constant 0 : index
      %c0_3 = arith.constant 0 : index
      %11 = vector.load %arg4[%c0, %c0_3] : memref<2x128xf32, #tpu.memory_space<vmem>>, vector<2x128xf32>
      %12 = vector.shape_cast %11 : vector<2x128xf32> to vector<2x128x1xf32>
      %c0_4 = arith.constant 0 : index
      %c0_5 = arith.constant 0 : index
      %c0_6 = arith.constant 0 : index
      %13 = vector.load %arg3[%c0_4, %c0_5, %c0_6] : memref<2x128x32xf32, #tpu.memory_space<vmem>>, vector<2x128x32xf32>
      %cst = arith.constant 0.000000e+00 : f32
      %14 = vector.broadcast %cst : f32 to vector<2x128x1xf32>
      %15 = arith.cmpf one, %12, %14 : vector<2x128x1xf32>
      %16 = vector.broadcast %12 : vector<2x128x1xf32> to vector<2x128x32xf32>
      %17 = arith.mulf %13, %16 : vector<2x128x32xf32>
      %cst_7 = arith.constant 0.000000e+00 : f32
      %18 = vector.shape_cast %15 : vector<2x128x1xi1> to vector<2x128x1xi1>
      %19 = vector.broadcast %18 : vector<2x128x1xi1> to vector<2x128x32xi1>
      %20 = vector.broadcast %cst_7 : f32 to vector<2x128x32xf32>
      %21 = arith.select %19, %17, %20 : vector<2x128x32xi1>, vector<2x128x32xf32>
      %c0_8 = arith.constant 0 : index
      %c0_9 = arith.constant 0 : index
      %22 = vector.load %arg8[%c0_8, %c0_9] : memref<2x32xf32, #tpu.memory_space<vmem>>, vector<2x32xf32>
      %cst_10 = arith.constant dense<0.000000e+00> : vector<2x32xf32>
      %23 = vector.multi_reduction <add>, %21, %cst_10 [1] : vector<2x128x32xf32> to vector<2x32xf32>
      %24 = arith.addf %22, %23 : vector<2x32xf32>
      %c0_11 = arith.constant 0 : index
      %c0_12 = arith.constant 0 : index
      %25 = vector.load %arg8[%c0_11, %c0_12] : memref<2x32xf32, #tpu.memory_space<vmem>>, vector<2x32xf32>
      tpu.vector_store %arg8[%c0_11, %c0_12], %24 {strides = array<i32>} : memref<2x32xf32, #tpu.memory_space<vmem>>, vector<2x32xf32>,
      %c0_13 = arith.constant 0 : index
      %c0_14 = arith.constant 0 : index
      %26 = vector.load %arg9[%c0_13, %c0_14] : memref<2x1xf32, #tpu.memory_space<vmem>>, vector<2x1xf32>
      %cst_15 = arith.constant dense<0.000000e+00> : vector<2xf32>
      %27 = vector.multi_reduction <add>, %11, %cst_15 [1] : vector<2x128xf32> to vector<2xf32>
      %28 = vector.shape_cast %27 : vector<2xf32> to vector<2x1xf32>
      %29 = arith.addf %26, %28 : vector<2x1xf32>
      %c0_16 = arith.constant 0 : index
      %c0_17 = arith.constant 0 : index
      %30 = vector.load %arg9[%c0_16, %c0_17] : memref<2x1xf32, #tpu.memory_space<vmem>>, vector<2x1xf32>
      tpu.vector_store %arg9[%c0_16, %c0_17], %29 {strides = array<i32>} : memref<2x1xf32, #tpu.memory_space<vmem>>, vector<2x1xf32>,
    } else {
    }
    %c1_i32 = arith.constant 1 : i32
    %8 = arith.cmpi eq, %arg1, %c1_i32 : i32
    %9 = arith.extui %8 : i1 to i32
    %c0_i32_2 = arith.constant 0 : i32
    %10 = arith.cmpi ne, %9, %c0_i32_2 : i32
    scf.if %10 {
      %c0 = arith.constant 0 : index
      %c0_3 = arith.constant 0 : index
      %11 = vector.load %arg9[%c0, %c0_3] : memref<2x1xf32, #tpu.memory_space<vmem>>, vector<2x1xf32>
      %cst = arith.constant 9.99999971E-10 : f32
      %12 = vector.broadcast %cst : f32 to vector<2x1xf32>
      %13 = arith.maximumf %11, %12 : vector<2x1xf32>
      %c0_4 = arith.constant 0 : index
      %c0_5 = arith.constant 0 : index
      %14 = vector.load %arg8[%c0_4, %c0_5] : memref<2x32xf32, #tpu.memory_space<vmem>>, vector<2x32xf32>
      %15 = vector.broadcast %13 : vector<2x1xf32> to vector<2x32xf32>
      %16 = arith.divf %14, %15 : vector<2x32xf32>
      %c0_6 = arith.constant 0 : index
      %c0_7 = arith.constant 0 : index
      %17 = vector.load %arg5[%c0_6, %c0_7] : memref<32x6xf32, #tpu.memory_space<vmem>>, vector<32x6xf32>
      %cst_8 = arith.constant dense<0.000000e+00> : vector<2x6xf32>
      %18 = tpu.matmul %16, %17, %cst_8 {dimension_numbers = #tpu.dot_dimension_numbers<[1], [0], [0], [1], [0, 0, 1, 1], [], []>} : vector<2x32xf32>, vector<32x6xf32>, vector<2x6xf32> -> vector<2x6xf32>
      %c0_9 = arith.constant 0 : index
      %c0_10 = arith.constant 0 : index
      %19 = vector.load %arg6[%c0_9, %c0_10] : memref<1x6xf32, #tpu.memory_space<vmem>>, vector<1x6xf32>
      %20 = vector.broadcast %19 : vector<1x6xf32> to vector<2x6xf32>
      %21 = arith.addf %18, %20 : vector<2x6xf32>
      %c0_11 = arith.constant 0 : index
      %c0_12 = arith.constant 0 : index
      %22 = vector.load %arg7[%c0_11, %c0_12] : memref<2x6xf32, #tpu.memory_space<vmem>>, vector<2x6xf32>
      tpu.vector_store %arg7[%c0_11, %c0_12], %21 {strides = array<i32>} : memref<2x6xf32, #tpu.memory_space<vmem>>, vector<2x6xf32>,
    } else {
    }
    return
  }
  func.func @transform_0(%arg0: i32, %arg1: i32, %arg2: memref<1xi32, #tpu.memory_space<smem>>) -> (i32, i32, i32) {
    %0 = arith.index_cast %arg0 : i32 to index
    %1 = memref.load %arg2[%0] : memref<1xi32, #tpu.memory_space<smem>>
    %c1_i32 = arith.constant 1 : i32
    %2 = arith.subi %1, %c1_i32 : i32
    %3 = arith.minsi %arg1, %2 : i32
    %c0_i32 = arith.constant 0 : i32
    %4 = arith.maxsi %3, %c0_i32 : i32
    %c0_i32_0 = arith.constant 0 : i32
    %c0_i32_1 = arith.constant 0 : i32
    return %arg0, %4, %c0_i32_0 : i32, i32, i32
  }
  func.func @transform_1(%arg0: i32, %arg1: i32, %arg2: memref<1xi32, #tpu.memory_space<smem>>) -> (i32, i32) {
    %0 = arith.index_cast %arg0 : i32 to index
    %1 = memref.load %arg2[%0] : memref<1xi32, #tpu.memory_space<smem>>
    %c1_i32 = arith.constant 1 : i32
    %2 = arith.subi %1, %c1_i32 : i32
    %3 = arith.minsi %arg1, %2 : i32
    %c0_i32 = arith.constant 0 : i32
    %4 = arith.maxsi %3, %c0_i32 : i32
    %c0_i32_0 = arith.constant 0 : i32
    return %arg0, %4 : i32, i32
  }
  func.func @transform_2(%arg0: i32, %arg1: i32, %arg2: memref<1xi32, #tpu.memory_space<smem>>) -> (i32, i32) {
    %c0_i32 = arith.constant 0 : i32
    %c0_i32_0 = arith.constant 0 : i32
    %c0_i32_1 = arith.constant 0 : i32
    return %c0_i32, %c0_i32_0 : i32, i32
  }
  func.func @transform_3(%arg0: i32, %arg1: i32, %arg2: memref<1xi32, #tpu.memory_space<smem>>) -> (i32, i32) {
    %c0_i32 = arith.constant 0 : i32
    %c0_i32_0 = arith.constant 0 : i32
    %c0_i32_1 = arith.constant 0 : i32
    return %c0_i32, %c0_i32_0 : i32, i32
  }
  func.func @transform_4(%arg0: i32, %arg1: i32, %arg2: memref<1xi32, #tpu.memory_space<smem>>) -> (i32, i32) {
    %c0_i32 = arith.constant 0 : i32
    %c0_i32_0 = arith.constant 0 : i32
    return %arg0, %c0_i32 : i32, i32
  }
}

</mosaic_0001>

<llo_original>
// kernel: tpu_custom_call.1
$region0: #{tpu_custom_call.1}
  #allocation0 [shape = 'u32[]', space=smem, size = 0x4, offset = 0x4, fixed_abs, tag = 'smem constant byte address 0x4 - core index']
  #allocation1 [shape = 'u32[144,128]{1,0:T(1,128)}', space=vmem, size = 0x12000, scoped, tag = 'internal scratch']
  #allocation2 [shape = 'f32[2,32]{1,0:T(2,128)}', space=vmem, size = 0x400, scoped, tag = 'scratch operand']
  #allocation3 [shape = 'f32[2,1]{1,0:T(2,128)}', space=vmem, size = 0x400, scoped, tag = 'scratch operand']
  #allocation4 [shape = 's32[1]{0}', space=sflag, size = 0x4, scoped, tag = 'scoped memory for tpu_custom_call.1']
  #allocation5 [shape = 's32[1]{0:T(128)S(6)}', space=smem, size = 0x200, scoped, tag = 'prefetched SMEM operand 0']
  %s0 = inlined_call_operand.<no memory space> [shape: s32[1], index: 0, kind: input, shape index: {}]
  %s1 = inlined_call_operand.vmem [shape: f32[2,256,32], index: 1, kind: input, shape index: {}]
  %s2 = inlined_call_operand.vmem [shape: f32[2,256], index: 2, kind: input, shape index: {}]
  %s3 = inlined_call_operand.vmem [shape: f32[32,6], index: 3, kind: input, shape index: {}]
  %s4 = inlined_call_operand.vmem [shape: f32[1,6], index: 4, kind: input, shape index: {}]
  %s5 = inlined_call_operand.hbm [shape: f32[2,6], index: 5, kind: output, shape index: {}]
  %s6 = sld [smem:[#allocation0]]
  $region99: #{tpu_custom_call.1} parent=0
    _
  %s8 = ssub.s32 1, %s6
  %s9 = scalar_select 0, %s8, %s6
  %10 = sst [smem:[#allocation5]] %s0
  $region1: #{tpu_custom_call.1} parent=0
    #allocation6 [shape = 'u8[262144]{0}', space=vmem, size = 0x40000, scoped, tag = 'input window, operand 1']
    #allocation7 [shape = 'u8[1024]{0}', space=vmem, size = 0x400, scoped, tag = 'output window, operand 0, single buffered']
    #allocation8 [shape = 's32[2]{0}', space=sflag, size = 0x8, scoped, tag = 'scoped memory for tpu_custom_call.1']
    %11 = vsyncpa [#allocation8], 0
    loop: start=0, step=1, limit=4
    $region2: #{tpu_custom_call.1} parent=1 // loop_pre_header
      _
    $region3: #{tpu_custom_call.1} parent=1 // loop_header
      %s13 = sphi 0, %s17
      %p14 = scmp.ge.s32.totalorder %s13, 4
      %s20 = sphi 0, %s32
      %s21 = sphi 0, %s28
      %s22 = sphi 0, %s20
      %s23 = sphi 0, %s21
      %s24 = sphi 0, %s22
      %s25 = sphi 0, %s23
      %s49 = sphi 0, %s51
      %s52 = sphi 0, %s49
      %s53 = sphi 0, %s52
      %s69 = sphi 0, %s53
      %s89 = sphi 0, %s91
      %s92 = sphi 0, %s89
      %s93 = sphi 0, %s92
      %s109 = sphi 0, %s93
      %s113 = sphi 0, %s113
      %s115 = sphi 0, %s113
      %s116 = sphi 0, %s115
      %s130 = sphi 0, %s116
      %s134 = sphi 0, %s134
      %s136 = sphi 0, %s134
      %s137 = sphi 0, %s136
      %s151 = sphi 0, %s137
      %s157 = sphi 0, %s159
      %s160 = sphi 0, %s157
      %s161 = sphi 0, %s160
      %s177 = sphi 0, %s161
    $region4: #{tpu_custom_call.1} parent=1 // loop_header_branch
      %16 = sbr.rel (%p14) target = $region8
    $region5: #{tpu_custom_call.1} parent=1 // loop_body
      %s18 = ssub.s32 %s13, 1
      %s19 = ssub.s32 %s13, 2
      %s26 = sadd.s32 1, %s21
      %p27 = scmp.ge.s32.totalorder %s26, 2
      %s28 = scalar_select %p27, 0, %s26
      %s29 = sadd.s32 1, %s20
      %s30 = scalar_select %p27, %s29, %s20
      %p31 = scmp.ge.s32.totalorder %s30, 1
      %s32 = scalar_select %p31, 0, %s30
      %s33 = sld [smem:[#allocation5 + %s20]]
      %s34 = ssub.s32 %s33, 1
      %p35 = scmp.lt.s32.totalorder %s21, %s34
      %s36 = scalar_select %p35, %s21, %s34
      %p37 = scmp.gt.s32.totalorder %s36, 0
      %s38 = scalar_select %p37, %s36, 0
      %s39 = sld [smem:[#allocation5 + %s32]]
      %s40 = ssub.s32 %s39, 1
      %p41 = scmp.lt.s32.totalorder %s28, %s40
      %s42 = scalar_select %p41, %s28, %s40
      %p43 = scmp.gt.s32.totalorder %s42, 0
      %s44 = scalar_select %p43, %s42, 0
      %s45 = ssub.s32 %s20, %s32
      %s46 = ssub.s32 %s38, %s44
      %s47 = sor.u32 %s45, %s46
      %p48 = scmp.eq.s32.totalorder %s47, 0
      %s50 = sadd.s32 %s49, 1
      %s51 = scalar_select %p48, %s49, %s50
      %p54 = pneg %p48
      %p55 = scmp.eq.s32.totalorder %s13, 1
      %p56 = por %p54, %p55
      %p57 = scmp.ne.s32.totalorder %s49, %s52
      %p58 = scmp.eq.s32.totalorder %s13, 0
      %p59 = por %p57, %p58
      %p60 = scmp.ne.s32.totalorder %s49, %s52
      %p61 = scmp.eq.s32.totalorder %s18, 1
      %p62 = por %p60, %p61
      %p63 = scmp.ne.s32.totalorder %s52, %s53
      %p64 = scmp.eq.s32.totalorder %s18, 0
      %p65 = por %p63, %p64
      %p66 = scmp.ne.s32.totalorder %s52, %s53
      %p67 = scmp.eq.s32.totalorder %s19, 1
      %p68 = por %p66, %p67
      %p70 = scmp.ne.s32.totalorder %s53, %s69
      %p71 = scmp.eq.s32.totalorder %s19, 0
      %p72 = por %p70, %p71
      %s73 = sld [smem:[#allocation5 + %s20]]
      %s74 = ssub.s32 %s73, 1
      %p75 = scmp.lt.s32.totalorder %s21, %s74
      %s76 = scalar_select %p75, %s21, %s74
      %p77 = scmp.gt.s32.totalorder %s76, 0
      %s78 = scalar_select %p77, %s76, 0
      %s79 = sld [smem:[#allocation5 + %s32]]
      %s80 = ssub.s32 %s79, 1
      %p81 = scmp.lt.s32.totalorder %s28, %s80
      %s82 = scalar_select %p81, %s28, %s80
      %p83 = scmp.gt.s32.totalorder %s82, 0
      %s84 = scalar_select %p83, %s82, 0
      %s85 = ssub.s32 %s20, %s32
      %s86 = ssub.s32 %s78, %s84
      %s87 = sor.u32 %s85, %s86
      %p88 = scmp.eq.s32.totalorder %s87, 0
      %s90 = sadd.s32 %s89, 1
      %s91 = scalar_select %p88, %s89, %s90
      %p94 = pneg %p88
      %p95 = scmp.eq.s32.totalorder %s13, 1
      %p96 = por %p94, %p95
      %p97 = scmp.ne.s32.totalorder %s89, %s92
      %p98 = scmp.eq.s32.totalorder %s13, 0
      %p99 = por %p97, %p98
      %p100 = scmp.ne.s32.totalorder %s89, %s92
      %p101 = scmp.eq.s32.totalorder %s18, 1
      %p102 = por %p100, %p101
      %p103 = scmp.ne.s32.totalorder %s92, %s93
      %p104 = scmp.eq.s32.totalorder %s18, 0
      %p105 = por %p103, %p104
      %p106 = scmp.ne.s32.totalorder %s92, %s93
      %p107 = scmp.eq.s32.totalorder %s19, 1
      %p108 = por %p106, %p107
      %p110 = scmp.ne.s32.totalorder %s93, %s109
      %p111 = scmp.eq.s32.totalorder %s19, 0
      %p112 = por %p110, %p111
      %s114 = sadd.s32 %s113, 1
      %p117 = scmp.eq.s32.totalorder %s13, 1
      %p118 = scmp.ne.s32.totalorder %s113, %s115
      %p119 = scmp.eq.s32.totalorder %s13, 0
      %p120 = por %p118, %p119
      %p121 = scmp.ne.s32.totalorder %s113, %s115
      %p122 = scmp.eq.s32.totalorder %s18, 1
      %p123 = por %p121, %p122
      %p124 = scmp.ne.s32.totalorder %s115, %s116
      %p125 = scmp.eq.s32.totalorder %s18, 0
      %p126 = por %p124, %p125
      %p127 = scmp.ne.s32.totalorder %s115, %s116
      %p128 = scmp.eq.s32.totalorder %s19, 1
      %p129 = por %p127, %p128
      %p131 = scmp.ne.s32.totalorder %s116, %s130
      %p132 = scmp.eq.s32.totalorder %s19, 0
      %p133 = por %p131, %p132
      %s135 = sadd.s32 %s134, 1
      %p138 = scmp.eq.s32.totalorder %s13, 1
      %p139 = scmp.ne.s32.totalorder %s134, %s136
      %p140 = scmp.eq.s32.totalorder %s13, 0
      %p141 = por %p139, %p140
      %p142 = scmp.ne.s32.totalorder %s134, %s136
      %p143 = scmp.eq.s32.totalorder %s18, 1
      %p144 = por %p142, %p143
      %p145 = scmp.ne.s32.totalorder %s136, %s137
      %p146 = scmp.eq.s32.totalorder %s18, 0
      %p147 = por %p145, %p146
      %p148 = scmp.ne.s32.totalorder %s136, %s137
      %p149 = scmp.eq.s32.totalorder %s19, 1
      %p150 = por %p148, %p149
      %p152 = scmp.ne.s32.totalorder %s137, %s151
      %p153 = scmp.eq.s32.totalorder %s19, 0
      %p154 = por %p152, %p153
      %s155 = ssub.s32 %s20, %s32
      %p156 = scmp.eq.s32.totalorder %s155, 0
      %s158 = sadd.s32 %s157, 1
      %s159 = scalar_select %p156, %s157, %s158
      %p162 = pneg %p156
      %p163 = scmp.eq.s32.totalorder %s13, 1
      %p164 = por %p162, %p163
      %p165 = scmp.ne.s32.totalorder %s157, %s160
      %p166 = scmp.eq.s32.totalorder %s13, 0
      %p167 = por %p165, %p166
      %p168 = scmp.ne.s32.totalorder %s157, %s160
      %p169 = scmp.eq.s32.totalorder %s18, 1
      %p170 = por %p168, %p169
      %p171 = scmp.ne.s32.totalorder %s160, %s161
      %p172 = scmp.eq.s32.totalorder %s18, 0
      %p173 = por %p171, %p172
      %p174 = scmp.ne.s32.totalorder %s160, %s161
      %p175 = scmp.eq.s32.totalorder %s19, 1
      %p176 = por %p174, %p175
      %p178 = scmp.ne.s32.totalorder %s161, %s177
      %p179 = scmp.eq.s32.totalorder %s19, 0
      %p180 = por %p178, %p179
      %p181 = scmp.le.s32.totalorder 1, %s13
      %p182 = scmp.lt.s32.totalorder %s13, 3
      %p183 = pnand %p181, %p182
      %p184 = pneg %p183
      // Predicated region
      $region9: #{tpu_custom_call.1} parent=5 // pred_check
        _
      $region10: #{tpu_custom_call.1} parent=5 // pred_check_branch
        %186 = sbr.rel (%p183) target = $region12
      $region11: #{tpu_custom_call.1} parent=5 // pred_region
        %s187 = ssub.s32 %s13, 1
        // Predicated region
        $region13: #{tpu_custom_call.1} parent=11 // pred_check
          %p188 = pneg %p126
        $region14: #{tpu_custom_call.1} parent=11 // pred_check_branch
          %190 = sbr.rel (%p188) target = $region16
        $region15: #{tpu_custom_call.1} parent=11 // pred_region
          _
        $region16: #{tpu_custom_call.1} parent=11 // pred_fallthru
          _
        // Predicated region
        $region17: #{tpu_custom_call.1} parent=11 // pred_check
          %p191 = pneg %p147
        $region18: #{tpu_custom_call.1} parent=11 // pred_check_branch
          %193 = sbr.rel (%p191) target = $region20
        $region19: #{tpu_custom_call.1} parent=11 // pred_region
          _
        $region20: #{tpu_custom_call.1} parent=11 // pred_fallthru
          _
      $region12: #{tpu_custom_call.1} parent=5 // pred_fallthru
        _
      %p194 = scmp.lt.s32.totalorder %s13, 2
      // Predicated region
      $region21: #{tpu_custom_call.1} parent=5 // pred_check
        %p195 = pneg %p194
      $region22: #{tpu_custom_call.1} parent=5 // pred_check_branch
        %197 = sbr.rel (%p195) target = $region24
      $region23: #{tpu_custom_call.1} parent=5 // pred_region
        // Predicated region
        $region25: #{tpu_custom_call.1} parent=23 // pred_check
          %p198 = pneg %p59
        $region26: #{tpu_custom_call.1} parent=23 // pred_check_branch
          %200 = sbr.rel (%p198) target = $region28
        $region27: #{tpu_custom_call.1} parent=23 // pred_region
          %s201 = sand.u32 %s49, 1
          %s202 = sand.u32 %s49, 1
          %s203 = smul.addr %s202, 256
          %s204 = scalar_lea.vmem [#allocation6], %s203
          %s205 = sld [smem:[#allocation5 + %s20]]
          %s206 = ssub.s32 %s205, 1
          %p207 = scmp.lt.s32.totalorder %s21, %s206
          %s208 = scalar_select %p207, %s21, %s206
          %p209 = scmp.gt.s32.totalorder %s208, 0
          %s210 = scalar_select %p209, %s208, 0
          %s211 = smul.u32 2, %s20
          %s212 = smul.u32 16, %s210
          %s213 = smul.addr %s211, 32
          %s214 = sadd.s32 %s212, %s213
          %s215 = smul.addr %s214, 8
          %s216 = scalar_lea.vmem %s1, %s215
          // Predicated region
          $region29: #{tpu_custom_call.1} parent=27 // pred_check
            _
          $region30: #{tpu_custom_call.1} parent=27 // pred_check_branch
            %218 = sbr.rel (0) target = $region32
          $region31: #{tpu_custom_call.1} parent=27 // pred_region
            // Predicated region
            $region33: #{tpu_custom_call.1} parent=31 // pred_check
              _
            $region34: #{tpu_custom_call.1} parent=31 // pred_check_branch
              %220 = sbr.rel (0) target = $region36
            $region35: #{tpu_custom_call.1} parent=31 // pred_region
              // Predicated region
              $region48: #{tpu_custom_call.1} parent=35 // pred_check
                _
              $region49: #{tpu_custom_call.1} parent=35 // pred_check_branch
                %297 = sbr.rel (0) target = $region51
              $region50: #{tpu_custom_call.1} parent=35 // pred_region
                loop: start=0, step=1, limit=1
                $region52: #{tpu_custom_call.1} parent=50 // loop_pre_header
                  _
                $region53: #{tpu_custom_call.1} parent=50 // loop_header
                  %s299 = sphi 0, %s303
                  %p300 = scmp.ge.s32.totalorder %s299, 1
                  %s304 = sphi %s216, %s216
                  %s305 = sphi %s204, %s204
                $region54: #{tpu_custom_call.1} parent=50 // loop_header_branch
                  %302 = sbr.rel (%p300) target = $region58
                $region55: #{tpu_custom_call.1} parent=50 // loop_body
                  %v306 = vld [vmem:[%s304] sm:$0xff]
                  %307 = vst [vmem:[%s305] sm:$0xff] %v306
                  %v308 = vld [vmem:[%s304 + $0x8] sm:$0xff]
                  %309 = vst [vmem:[%s305 + $0x8] sm:$0xff] %v308
                  %v310 = vld [vmem:[%s304 + $0x10] sm:$0xff]
                  %311 = vst [vmem:[%s305 + $0x10] sm:$0xff] %v310
                  %v312 = vld [vmem:[%s304 + $0x18] sm:$0xff]
                  %313 = vst [vmem:[%s305 + $0x18] sm:$0xff] %v312
                  %v314 = vld [vmem:[%s304 + $0x20] sm:$0xff]
                  %315 = vst [vmem:[%s305 + $0x20] sm:$0xff] %v314
                  %v316 = vld [vmem:[%s304 + $0x28] sm:$0xff]
                  %317 = vst [vmem:[%s305 + $0x28] sm:$0xff] %v316
                  %v318 = vld [vmem:[%s304 + $0x30] sm:$0xff]
                  %319 = vst [vmem:[%s305 + $0x30] sm:$0xff] %v318
                  %v320 = vld [vmem:[%s304 + $0x38] sm:$0xff]
                  %321 = vst [vmem:[%s305 + $0x38] sm:$0xff] %v320
                  %v322 = vld [vmem:[%s304 + $0x40] sm:$0xff]
                  %323 = vst [vmem:[%s305 + $0x40] sm:$0xff] %v322
                  %v324 = vld [vmem:[%s304 + $0x48] sm:$0xff]
                  %325 = vst [vmem:[%s305 + $0x48] sm:$0xff] %v324
                  %v326 = vld [vmem:[%s304 + $0x50] sm:$0xff]
                  %327 = vst [vmem:[%s305 + $0x50] sm:$0xff] %v326
                  %v328 = vld [vmem:[%s304 + $0x58] sm:$0xff]
                  %329 = vst [vmem:[%s305 + $0x58] sm:$0xff] %v328
                  %v330 = vld [vmem:[%s304 + $0x60] sm:$0xff]
                  %331 = vst [vmem:[%s305 + $0x60] sm:$0xff] %v330
                  %v332 = vld [vmem:[%s304 + $0x68] sm:$0xff]
                  %333 = vst [vmem:[%s305 + $0x68] sm:$0xff] %v332
                  %v334 = vld [vmem:[%s304 + $0x70] sm:$0xff]
                  %335 = vst [vmem:[%s305 + $0x70] sm:$0xff] %v334
                  %v336 = vld [vmem:[%s304 + $0x78] sm:$0xff]
                  %337 = vst [vmem:[%s305 + $0x78] sm:$0xff] %v336
                  %v338 = vld [vmem:[%s304 + $0x100] sm:$0xff]
                  %339 = vst [vmem:[%s305 + $0x80] sm:$0xff] %v338
                  %v340 = vld [vmem:[%s304 + $0x108] sm:$0xff]
                  %341 = vst [vmem:[%s305 + $0x88] sm:$0xff] %v340
                  %v342 = vld [vmem:[%s304 + $0x110] sm:$0xff]
                  %343 = vst [vmem:[%s305 + $0x90] sm:$0xff] %v342
                  %v344 = vld [vmem:[%s304 + $0x118] sm:$0xff]
                  %345 = vst [vmem:[%s305 + $0x98] sm:$0xff] %v344
                  %v346 = vld [vmem:[%s304 + $0x120] sm:$0xff]
                  %347 = vst [vmem:[%s305 + $0xa0] sm:$0xff] %v346
                  %v348 = vld [vmem:[%s304 + $0x128] sm:$0xff]
                  %349 = vst [vmem:[%s305 + $0xa8] sm:$0xff] %v348
                  %v350 = vld [vmem:[%s304 + $0x130] sm:$0xff]
                  %351 = vst [vmem:[%s305 + $0xb0] sm:$0xff] %v350
                  %v352 = vld [vmem:[%s304 + $0x138] sm:$0xff]
                  %353 = vst [vmem:[%s305 + $0xb8] sm:$0xff] %v352
                  %v354 = vld [vmem:[%s304 + $0x140] sm:$0xff]
                  %355 = vst [vmem:[%s305 + $0xc0] sm:$0xff] %v354
                  %v356 = vld [vmem:[%s304 + $0x148] sm:$0xff]
                  %357 = vst [vmem:[%s305 + $0xc8] sm:$0xff] %v356
                  %v358 = vld [vmem:[%s304 + $0x150] sm:$0xff]
                  %359 = vst [vmem:[%s305 + $0xd0] sm:$0xff] %v358
                  %v360 = vld [vmem:[%s304 + $0x158] sm:$0xff]
                  %361 = vst [vmem:[%s305 + $0xd8] sm:$0xff] %v360
                  %v362 = vld [vmem:[%s304 + $0x160] sm:$0xff]
                  %363 = vst [vmem:[%s305 + $0xe0] sm:$0xff] %v362
                  %v364 = vld [vmem:[%s304 + $0x168] sm:$0xff]
                  %365 = vst [vmem:[%s305 + $0xe8] sm:$0xff] %v364
                  %v366 = vld [vmem:[%s304 + $0x170] sm:$0xff]
                  %367 = vst [vmem:[%s305 + $0xf0] sm:$0xff] %v366
                  %v368 = vld [vmem:[%s304 + $0x178] sm:$0xff]
                  %369 = vst [vmem:[%s305 + $0xf8] sm:$0xff] %v368
                $region56: #{tpu_custom_call.1} parent=50 // loop_footer
                  %s303 = sadd.s32 1, %s299
                $region57: #{tpu_custom_call.1} parent=50 // loop_footer_branch
                  %298 = sbr.rel target = $region53
                $region58: #{tpu_custom_call.1} parent=50 // loop_exit
                  _
              $region51: #{tpu_custom_call.1} parent=35 // pred_fallthru
                _
              // Predicated region
              $region59: #{tpu_custom_call.1} parent=35 // pred_check
                _
              $region60: #{tpu_custom_call.1} parent=35 // pred_check_branch
                %371 = sbr.rel target = $region62
              $region61: #{tpu_custom_call.1} parent=35 // pred_region
                _
              $region62: #{tpu_custom_call.1} parent=35 // pred_fallthru
                _
            $region36: #{tpu_custom_call.1} parent=31 // pred_fallthru
              _
            // Predicated region
            $region37: #{tpu_custom_call.1} parent=31 // pred_check
              _
            $region38: #{tpu_custom_call.1} parent=31 // pred_check_branch
              %222 = sbr.rel target = $region40
            $region39: #{tpu_custom_call.1} parent=31 // pred_region
              loop: start=0, step=1, limit=1
              $region41: #{tpu_custom_call.1} parent=39 // loop_pre_header
                _
              $region42: #{tpu_custom_call.1} parent=39 // loop_header
                %s225 = sphi 0, %s229
                %p226 = scmp.ge.s32.totalorder %s225, 1
                %s230 = sphi %s216, %s216
                %s231 = sphi %s204, %s204
              $region43: #{tpu_custom_call.1} parent=39 // loop_header_branch
                %228 = sbr.rel (%p226) target = $region47
              $region44: #{tpu_custom_call.1} parent=39 // loop_body
                %v232 = vld [vmem:[%s230] sm:$0xff]
                %233 = vst [vmem:[%s231] sm:$0xff] %v232
                %v234 = vld [vmem:[%s230 + $0x8] sm:$0xff]
                %235 = vst [vmem:[%s231 + $0x8] sm:$0xff] %v234
                %v236 = vld [vmem:[%s230 + $0x10] sm:$0xff]
                %237 = vst [vmem:[%s231 + $0x10] sm:$0xff] %v236
                %v238 = vld [vmem:[%s230 + $0x18] sm:$0xff]
                %239 = vst [vmem:[%s231 + $0x18] sm:$0xff] %v238
                %v240 = vld [vmem:[%s230 + $0x20] sm:$0xff]
                %241 = vst [vmem:[%s231 + $0x20] sm:$0xff] %v240
                %v242 = vld [vmem:[%s230 + $0x28] sm:$0xff]
                %243 = vst [vmem:[%s231 + $0x28] sm:$0xff] %v242
                %v244 = vld [vmem:[%s230 + $0x30] sm:$0xff]
                %245 = vst [vmem:[%s231 + $0x30] sm:$0xff] %v244
                %v246 = vld [vmem:[%s230 + $0x38] sm:$0xff]
                %247 = vst [vmem:[%s231 + $0x38] sm:$0xff] %v246
                %v248 = vld [vmem:[%s230 + $0x40] sm:$0xff]
                %249 = vst [vmem:[%s231 + $0x40] sm:$0xff] %v248
                %v250 = vld [vmem:[%s230 + $0x48] sm:$0xff]
                %251 = vst [vmem:[%s231 + $0x48] sm:$0xff] %v250
                %v252 = vld [vmem:[%s230 + $0x50] sm:$0xff]
                %253 = vst [vmem:[%s231 + $0x50] sm:$0xff] %v252
                %v254 = vld [vmem:[%s230 + $0x58] sm:$0xff]
                %255 = vst [vmem:[%s231 + $0x58] sm:$0xff] %v254
                %v256 = vld [vmem:[%s230 + $0x60] sm:$0xff]
                %257 = vst [vmem:[%s231 + $0x60] sm:$0xff] %v256
                %v258 = vld [vmem:[%s230 + $0x68] sm:$0xff]
                %259 = vst [vmem:[%s231 + $0x68] sm:$0xff] %v258
                %v260 = vld [vmem:[%s230 + $0x70] sm:$0xff]
                %261 = vst [vmem:[%s231 + $0x70] sm:$0xff] %v260
                %v262 = vld [vmem:[%s230 + $0x78] sm:$0xff]
                %263 = vst [vmem:[%s231 + $0x78] sm:$0xff] %v262
                %v264 = vld [vmem:[%s230 + $0x100] sm:$0xff]
                %265 = vst [vmem:[%s231 + $0x80] sm:$0xff] %v264
                %v266 = vld [vmem:[%s230 + $0x108] sm:$0xff]
                %267 = vst [vmem:[%s231 + $0x88] sm:$0xff] %v266
                %v268 = vld [vmem:[%s230 + $0x110] sm:$0xff]
                %269 = vst [vmem:[%s231 + $0x90] sm:$0xff] %v268
                %v270 = vld [vmem:[%s230 + $0x118] sm:$0xff]
                %271 = vst [vmem:[%s231 + $0x98] sm:$0xff] %v270
                %v272 = vld [vmem:[%s230 + $0x120] sm:$0xff]
                %273 = vst [vmem:[%s231 + $0xa0] sm:$0xff] %v272
                %v274 = vld [vmem:[%s230 + $0x128] sm:$0xff]
                %275 = vst [vmem:[%s231 + $0xa8] sm:$0xff] %v274
                %v276 = vld [vmem:[%s230 + $0x130] sm:$0xff]
                %277 = vst [vmem:[%s231 + $0xb0] sm:$0xff] %v276
                %v278 = vld [vmem:[%s230 + $0x138] sm:$0xff]
                %279 = vst [vmem:[%s231 + $0xb8] sm:$0xff] %v278
                %v280 = vld [vmem:[%s230 + $0x140] sm:$0xff]
                %281 = vst [vmem:[%s231 + $0xc0] sm:$0xff] %v280
                %v282 = vld [vmem:[%s230 + $0x148] sm:$0xff]
                %283 = vst [vmem:[%s231 + $0xc8] sm:$0xff] %v282
                %v284 = vld [vmem:[%s230 + $0x150] sm:$0xff]
                %285 = vst [vmem:[%s231 + $0xd0] sm:$0xff] %v284
                %v286 = vld [vmem:[%s230 + $0x158] sm:$0xff]
                %287 = vst [vmem:[%s231 + $0xd8] sm:$0xff] %v286
                %v288 = vld [vmem:[%s230 + $0x160] sm:$0xff]
                %289 = vst [vmem:[%s231 + $0xe0] sm:$0xff] %v288
                %v290 = vld [vmem:[%s230 + $0x168] sm:$0xff]
                %291 = vst [vmem:[%s231 + $0xe8] sm:$0xff] %v290
                %v292 = vld [vmem:[%s230 + $0x170] sm:$0xff]
                %293 = vst [vmem:[%s231 + $0xf0] sm:$0xff] %v292
                %v294 = vld [vmem:[%s230 + $0x178] sm:$0xff]
                %295 = vst [vmem:[%s231 + $0xf8] sm:$0xff] %v294
              $region45: #{tpu_custom_call.1} parent=39 // loop_footer
                %s229 = sadd.s32 1, %s225
              $region46: #{tpu_custom_call.1} parent=39 // loop_footer_branch
                %224 = sbr.rel target = $region42
              $region47: #{tpu_custom_call.1} parent=39 // loop_exit
                _
            $region40: #{tpu_custom_call.1} parent=31 // pred_fallthru
              _
          $region32: #{tpu_custom_call.1} parent=27 // pred_fallthru
            _
          %372 = vnop
        $region28: #{tpu_custom_call.1} parent=23 // pred_fallthru
          _
        // Predicated region
        $region63: #{tpu_custom_call.1} parent=23 // pred_check
          %p373 = pneg %p99
        $region64: #{tpu_custom_call.1} parent=23 // pred_check_branch
          %375 = sbr.rel (%p373) target = $region66
        $region65: #{tpu_custom_call.1} parent=23 // pred_region
          %s376 = sld [smem:[#allocation5 + %s20]]
          %s377 = ssub.s32 %s376, 1
          %p378 = scmp.lt.s32.totalorder %s21, %s377
          %s379 = scalar_select %p378, %s21, %s377
          %p380 = scmp.gt.s32.totalorder %s379, 0
          %s381 = scalar_select %p380, %s379, 0
          %p382 = scmp.lt.s32.totalorder %s20, 0
          %s383 = scalar_select %p382, %s20, 0
          %p384 = scmp.lt.s32.totalorder %s381, 1
          %s385 = scalar_select %p384, %s381, 1
          %s386 = smul.addr %s383, 2
          %s387 = sadd.s32 %s385, %s386
          %s388 = smul.addr %s387, 2
          %s389 = scalar_lea.vmem %s2, %s388
          %s390 = sld [smem:[#allocation5 + %s20]]
          %s391 = ssub.s32 %s390, 1
          %p392 = scmp.lt.s32.totalorder %s21, %s391
          %s393 = scalar_select %p392, %s21, %s391
          %p394 = scmp.gt.s32.totalorder %s393, 0
          %s395 = scalar_select %p394, %s393, 0
        $region66: #{tpu_custom_call.1} parent=23 // pred_fallthru
          _
      $region24: #{tpu_custom_call.1} parent=5 // pred_fallthru
        _
      %p396 = scmp.le.s32.totalorder 1, %s13
      %p397 = scmp.lt.s32.totalorder %s13, 3
      %p398 = pnand %p396, %p397
      %p399 = pneg %p398
      // Predicated region
      $region67: #{tpu_custom_call.1} parent=5 // pred_check
        _
      $region68: #{tpu_custom_call.1} parent=5 // pred_check_branch
        %401 = sbr.rel (%p398) target = $region70
      $region69: #{tpu_custom_call.1} parent=5 // pred_region
        %s402 = ssub.s32 %s13, 1
        %s403 = sand.u32 %s52, 1
        %s404 = sand.u32 %s52, 1
        %s405 = smul.addr %s404, 256
        %s406 = scalar_lea.vmem [#allocation6], %s405
        // Predicated region
        $region71: #{tpu_custom_call.1} parent=69 // pred_check
          %p407 = pneg %p65
        $region72: #{tpu_custom_call.1} parent=69 // pred_check_branch
          %409 = sbr.rel (%p407) target = $region74
        $region73: #{tpu_custom_call.1} parent=69 // pred_region
          _
        $region74: #{tpu_custom_call.1} parent=69 // pred_fallthru
          _
        %s410 = sand.u32 %s52, 1
        %s411 = sand.u32 %s52, 1
        %s412 = smul.addr %s411, 256
        %s413 = scalar_lea.vmem [#allocation6], %s412
        %p414 = pneg %p65
        %p415 = pneg %p62
        %s416 = sld [smem:[#allocation5 + %s22]]
        %s417 = ssub.s32 %s416, 1
        %p418 = scmp.lt.s32.totalorder %s23, %s417
        %s419 = scalar_select %p418, %s23, %s417
        %p420 = scmp.gt.s32.totalorder %s419, 0
        %s421 = scalar_select %p420, %s419, 0
        %p422 = scmp.lt.s32.totalorder %s22, 0
        %s423 = scalar_select %p422, %s22, 0
        %p424 = scmp.lt.s32.totalorder %s421, 1
        %s425 = scalar_select %p424, %s421, 1
        %s426 = smul.addr %s423, 2
        %s427 = sadd.s32 %s425, %s426
        %s428 = smul.addr %s427, 2
        %s429 = scalar_lea.vmem %s2, %s428
        %p430 = pneg %p105
        %p431 = pneg %p102
        %p432 = pneg %p126
        %p433 = pneg %p123
        %p434 = pneg %p147
        %p435 = pneg %p144
        %p436 = pneg %p173
        %p437 = pneg %p170
        %s438 = sld [smem:[#allocation5 + %s22]]
        %s439 = ssub.s32 %s438, 1
        %p440 = scmp.lt.s32.totalorder %s23, %s439
        %s441 = scalar_select %p440, %s23, %s439
        %p442 = scmp.gt.s32.totalorder %s441, 0
        %s443 = scalar_select %p442, %s441, 0
        %s444 = smul.u32 2, %s22
        %s445 = smul.u32 16, %s443
        %s446 = sld [smem:[#allocation5 + %s22]]
        %s447 = ssub.s32 %s446, 1
        %p448 = scmp.lt.s32.totalorder %s23, %s447
        %s449 = scalar_select %p448, %s23, %s447
        %p450 = scmp.gt.s32.totalorder %s449, 0
        %s451 = scalar_select %p450, %s449, 0
        %p452 = scmp.lt.s32.totalorder %s22, 0
        %s453 = scalar_select %p452, %s22, 0
        %p454 = scmp.lt.s32.totalorder %s451, 1
        %s455 = scalar_select %p454, %s451, 1
        %s456 = smul.addr %s453, 2
        %s457 = sadd.s32 %s455, %s456
        %s458 = smul.addr %s457, 2
        %s459 = scalar_lea.vmem %s2, %s458
        %s460 = sld [smem:[#allocation5 + %s22]]
        %s461 = ssub.s32 %s460, 1
        %p462 = scmp.lt.s32.totalorder %s23, %s461
        %s463 = scalar_select %p462, %s23, %s461
        %p464 = scmp.gt.s32.totalorder %s463, 0
        %s465 = scalar_select %p464, %s463, 0
        %p466 = scmp.eq.s32.totalorder %s23, 0
        // Predicated region
        $region75: #{tpu_custom_call.1} parent=69 // pred_check
          %p467 = pneg %p466
        $region76: #{tpu_custom_call.1} parent=69 // pred_check_branch
          %469 = sbr.rel (%p467) target = $region78
        $region77: #{tpu_custom_call.1} parent=69 // pred_region
          %vm470 = vcmask 254976
          %471 = vst.msk [vmem:[#allocation2] sm:$0x3] %vm470, 0.0
          %vm472 = vcmask 1024
          %473 = vst.msk [vmem:[#allocation3] sm:$0x3] %vm472, 0.0
        $region78: #{tpu_custom_call.1} parent=69 // pred_fallthru
          _
        %s474 = sld [smem:[#allocation5 + %s22]]
        %p475 = scmp.lt.s32.totalorder %s23, %s474
        // Predicated region
        $region79: #{tpu_custom_call.1} parent=69 // pred_check
          %p476 = pneg %p475
        $region80: #{tpu_custom_call.1} parent=69 // pred_check_branch
          %478 = sbr.rel (%p476) target = $region82
        $region81: #{tpu_custom_call.1} parent=69 // pred_region
          %v479 = vld [vmem:[%s459] sm:$0x3]
          %v480 = vlaneseq
          %v481 = vshrl.u32 %v480, 7
          %v482 = vsub.s32 0, %v481
          %v483 = vrot.slane %v479, %v482
          %485 = vbcast.lane.b32.xlu0 %v483, 256
          %v486 = vpop.permute.xlu0 %485
          %s488 = sor.u32 256, 8
          %489 = vbcast.lane.b32.xlu0 %v483, %s488
          %v490 = vpop.permute.xlu0 %489
          %s492 = sor.u32 256, 16
          %493 = vbcast.lane.b32.xlu0 %v483, %s492
          %v494 = vpop.permute.xlu0 %493
          %s496 = sor.u32 256, 24
          %497 = vbcast.lane.b32.xlu0 %v483, %s496
          %v498 = vpop.permute.xlu0 %497
          %s500 = sor.u32 256, 32
          %501 = vbcast.lane.b32.xlu0 %v483, %s500
          %v502 = vpop.permute.xlu0 %501
          %s504 = sor.u32 256, 40
          %505 = vbcast.lane.b32.xlu0 %v483, %s504
          %v506 = vpop.permute.xlu0 %505
          %s508 = sor.u32 256, 48
          %509 = vbcast.lane.b32.xlu0 %v483, %s508
          %v510 = vpop.permute.xlu0 %509
          %s512 = sor.u32 256, 56
          %513 = vbcast.lane.b32.xlu0 %v483, %s512
          %v514 = vpop.permute.xlu0 %513
          %s516 = sor.u32 256, 64
          %517 = vbcast.lane.b32.xlu0 %v483, %s516
          %v518 = vpop.permute.xlu0 %517
          %s520 = sor.u32 256, 72
          %521 = vbcast.lane.b32.xlu0 %v483, %s520
          %v522 = vpop.permute.xlu0 %521
          %s524 = sor.u32 256, 80
          %525 = vbcast.lane.b32.xlu0 %v483, %s524
          %v526 = vpop.permute.xlu0 %525
          %s528 = sor.u32 256, 88
          %529 = vbcast.lane.b32.xlu0 %v483, %s528
          %v530 = vpop.permute.xlu0 %529
          %s532 = sor.u32 256, 96
          %533 = vbcast.lane.b32.xlu0 %v483, %s532
          %v534 = vpop.permute.xlu0 %533
          %s536 = sor.u32 256, 104
          %537 = vbcast.lane.b32.xlu0 %v483, %s536
          %v538 = vpop.permute.xlu0 %537
          %s540 = sor.u32 256, 112
          %541 = vbcast.lane.b32.xlu0 %v483, %s540
          %v542 = vpop.permute.xlu0 %541
          %s544 = sor.u32 256, 120
          %545 = vbcast.lane.b32.xlu0 %v483, %s544
          %v546 = vpop.permute.xlu0 %545
          %v547 = vlaneseq
          %v548 = vshrl.u32 %v547, 7
          %v549 = vsub.s32 1, %v548
          %v550 = vrot.slane %v479, %v549
          %552 = vbcast.lane.b32.xlu0 %v550, 256
          %v553 = vpop.permute.xlu0 %552
          %s555 = sor.u32 256, 8
          %556 = vbcast.lane.b32.xlu0 %v550, %s555
          %v557 = vpop.permute.xlu0 %556
          %s559 = sor.u32 256, 16
          %560 = vbcast.lane.b32.xlu0 %v550, %s559
          %v561 = vpop.permute.xlu0 %560
          %s563 = sor.u32 256, 24
          %564 = vbcast.lane.b32.xlu0 %v550, %s563
          %v565 = vpop.permute.xlu0 %564
          %s567 = sor.u32 256, 32
          %568 = vbcast.lane.b32.xlu0 %v550, %s567
          %v569 = vpop.permute.xlu0 %568
          %s571 = sor.u32 256, 40
          %572 = vbcast.lane.b32.xlu0 %v550, %s571
          %v573 = vpop.permute.xlu0 %572
          %s575 = sor.u32 256, 48
          %576 = vbcast.lane.b32.xlu0 %v550, %s575
          %v577 = vpop.permute.xlu0 %576
          %s579 = sor.u32 256, 56
          %580 = vbcast.lane.b32.xlu0 %v550, %s579
          %v581 = vpop.permute.xlu0 %580
          %s583 = sor.u32 256, 64
          %584 = vbcast.lane.b32.xlu0 %v550, %s583
          %v585 = vpop.permute.xlu0 %584
          %s587 = sor.u32 256, 72
          %588 = vbcast.lane.b32.xlu0 %v550, %s587
          %v589 = vpop.permute.xlu0 %588
          %s591 = sor.u32 256, 80
          %592 = vbcast.lane.b32.xlu0 %v550, %s591
          %v593 = vpop.permute.xlu0 %592
          %s595 = sor.u32 256, 88
          %596 = vbcast.lane.b32.xlu0 %v550, %s595
          %v597 = vpop.permute.xlu0 %596
          %s599 = sor.u32 256, 96
          %600 = vbcast.lane.b32.xlu0 %v550, %s599
          %v601 = vpop.permute.xlu0 %600
          %s603 = sor.u32 256, 104
          %604 = vbcast.lane.b32.xlu0 %v550, %s603
          %v605 = vpop.permute.xlu0 %604
          %s607 = sor.u32 256, 112
          %608 = vbcast.lane.b32.xlu0 %v550, %s607
          %v609 = vpop.permute.xlu0 %608
          %s611 = sor.u32 256, 120
          %612 = vbcast.lane.b32.xlu0 %v550, %s611
          %v613 = vpop.permute.xlu0 %612
          %v614 = vld [vmem:[%s406] sm:$0xff]
          %v615 = vld [vmem:[%s406 + $0x8] sm:$0xff]
          %v616 = vld [vmem:[%s406 + $0x10] sm:$0xff]
          %v617 = vld [vmem:[%s406 + $0x18] sm:$0xff]
          %v618 = vld [vmem:[%s406 + $0x20] sm:$0xff]
          %v619 = vld [vmem:[%s406 + $0x28] sm:$0xff]
          %v620 = vld [vmem:[%s406 + $0x30] sm:$0xff]
          %v621 = vld [vmem:[%s406 + $0x38] sm:$0xff]
          %v622 = vld [vmem:[%s406 + $0x40] sm:$0xff]
          %v623 = vld [vmem:[%s406 + $0x48] sm:$0xff]
          %v624 = vld [vmem:[%s406 + $0x50] sm:$0xff]
          %v625 = vld [vmem:[%s406 + $0x58] sm:$0xff]
          %v626 = vld [vmem:[%s406 + $0x60] sm:$0xff]
          %v627 = vld [vmem:[%s406 + $0x68] sm:$0xff]
          %v628 = vld [vmem:[%s406 + $0x70] sm:$0xff]
          %v629 = vld [vmem:[%s406 + $0x78] sm:$0xff]
          %v630 = vld [vmem:[%s406 + $0x80] sm:$0xff]
          %v631 = vld [vmem:[%s406 + $0x88] sm:$0xff]
          %v632 = vld [vmem:[%s406 + $0x90] sm:$0xff]
          %v633 = vld [vmem:[%s406 + $0x98] sm:$0xff]
          %v634 = vld [vmem:[%s406 + $0xa0] sm:$0xff]
          %v635 = vld [vmem:[%s406 + $0xa8] sm:$0xff]
          %v636 = vld [vmem:[%s406 + $0xb0] sm:$0xff]
          %v637 = vld [vmem:[%s406 + $0xb8] sm:$0xff]
          %v638 = vld [vmem:[%s406 + $0xc0] sm:$0xff]
          %v639 = vld [vmem:[%s406 + $0xc8] sm:$0xff]
          %v640 = vld [vmem:[%s406 + $0xd0] sm:$0xff]
          %v641 = vld [vmem:[%s406 + $0xd8] sm:$0xff]
          %v642 = vld [vmem:[%s406 + $0xe0] sm:$0xff]
          %v643 = vld [vmem:[%s406 + $0xe8] sm:$0xff]
          %v644 = vld [vmem:[%s406 + $0xf0] sm:$0xff]
          %v645 = vld [vmem:[%s406 + $0xf8] sm:$0xff]
          %vm646 = vcmp.ne.f32.partialorder %v486, 0.0
          %vm647 = vcmp.ne.f32.partialorder %v490, 0.0
          %vm648 = vcmp.ne.f32.partialorder %v494, 0.0
          %vm649 = vcmp.ne.f32.partialorder %v498, 0.0
          %vm650 = vcmp.ne.f32.partialorder %v502, 0.0
          %vm651 = vcmp.ne.f32.partialorder %v506, 0.0
          %vm652 = vcmp.ne.f32.partialorder %v510, 0.0
          %vm653 = vcmp.ne.f32.partialorder %v514, 0.0
          %vm654 = vcmp.ne.f32.partialorder %v518, 0.0
          %vm655 = vcmp.ne.f32.partialorder %v522, 0.0
          %vm656 = vcmp.ne.f32.partialorder %v526, 0.0
          %vm657 = vcmp.ne.f32.partialorder %v530, 0.0
          %vm658 = vcmp.ne.f32.partialorder %v534, 0.0
          %vm659 = vcmp.ne.f32.partialorder %v538, 0.0
          %vm660 = vcmp.ne.f32.partialorder %v542, 0.0
          %vm661 = vcmp.ne.f32.partialorder %v546, 0.0
          %vm662 = vcmp.ne.f32.partialorder %v553, 0.0
          %vm663 = vcmp.ne.f32.partialorder %v557, 0.0
          %vm664 = vcmp.ne.f32.partialorder %v561, 0.0
          %vm665 = vcmp.ne.f32.partialorder %v565, 0.0
          %vm666 = vcmp.ne.f32.partialorder %v569, 0.0
          %vm667 = vcmp.ne.f32.partialorder %v573, 0.0
          %vm668 = vcmp.ne.f32.partialorder %v577, 0.0
          %vm669 = vcmp.ne.f32.partialorder %v581, 0.0
          %vm670 = vcmp.ne.f32.partialorder %v585, 0.0
          %vm671 = vcmp.ne.f32.partialorder %v589, 0.0
          %vm672 = vcmp.ne.f32.partialorder %v593, 0.0
          %vm673 = vcmp.ne.f32.partialorder %v597, 0.0
          %vm674 = vcmp.ne.f32.partialorder %v601, 0.0
          %vm675 = vcmp.ne.f32.partialorder %v605, 0.0
          %vm676 = vcmp.ne.f32.partialorder %v609, 0.0
          %vm677 = vcmp.ne.f32.partialorder %v613, 0.0
          %v678 = vmul.f32 %v614, %v486
          %v679 = vmul.f32 %v615, %v490
          %v680 = vmul.f32 %v616, %v494
          %v681 = vmul.f32 %v617, %v498
          %v682 = vmul.f32 %v618, %v502
          %v683 = vmul.f32 %v619, %v506
          %v684 = vmul.f32 %v620, %v510
          %v685 = vmul.f32 %v621, %v514
          %v686 = vmul.f32 %v622, %v518
          %v687 = vmul.f32 %v623, %v522
          %v688 = vmul.f32 %v624, %v526
          %v689 = vmul.f32 %v625, %v530
          %v690 = vmul.f32 %v626, %v534
          %v691 = vmul.f32 %v627, %v538
          %v692 = vmul.f32 %v628, %v542
          %v693 = vmul.f32 %v629, %v546
          %v694 = vmul.f32 %v630, %v553
          %v695 = vmul.f32 %v631, %v557
          %v696 = vmul.f32 %v632, %v561
          %v697 = vmul.f32 %v633, %v565
          %v698 = vmul.f32 %v634, %v569
          %v699 = vmul.f32 %v635, %v573
          %v700 = vmul.f32 %v636, %v577
          %v701 = vmul.f32 %v637, %v581
          %v702 = vmul.f32 %v638, %v585
          %v703 = vmul.f32 %v639, %v589
          %v704 = vmul.f32 %v640, %v593
          %v705 = vmul.f32 %v641, %v597
          %v706 = vmul.f32 %v642, %v601
          %v707 = vmul.f32 %v643, %v605
          %v708 = vmul.f32 %v644, %v609
          %v709 = vmul.f32 %v645, %v613
          %v710 = vsel %vm646, 1, 0
          %v711 = vsel %vm647, 1, 0
          %v712 = vsel %vm648, 1, 0
          %v713 = vsel %vm649, 1, 0
          %v714 = vsel %vm650, 1, 0
          %v715 = vsel %vm651, 1, 0
          %v716 = vsel %vm652, 1, 0
          %v717 = vsel %vm653, 1, 0
          %v718 = vsel %vm654, 1, 0
          %v719 = vsel %vm655, 1, 0
          %v720 = vsel %vm656, 1, 0
          %v721 = vsel %vm657, 1, 0
          %v722 = vsel %vm658, 1, 0
          %v723 = vsel %vm659, 1, 0
          %v724 = vsel %vm660, 1, 0
          %v725 = vsel %vm661, 1, 0
          %v726 = vsel %vm662, 1, 0
          %v727 = vsel %vm663, 1, 0
          %v728 = vsel %vm664, 1, 0
          %v729 = vsel %vm665, 1, 0
          %v730 = vsel %vm666, 1, 0
          %v731 = vsel %vm667, 1, 0
          %v732 = vsel %vm668, 1, 0
          %v733 = vsel %vm669, 1, 0
          %v734 = vsel %vm670, 1, 0
          %v735 = vsel %vm671, 1, 0
          %v736 = vsel %vm672, 1, 0
          %v737 = vsel %vm673, 1, 0
          %v738 = vsel %vm674, 1, 0
          %v739 = vsel %vm675, 1, 0
          %v740 = vsel %vm676, 1, 0
          %v741 = vsel %vm677, 1, 0
          %vm742 = vcmp.eq.s32.totalorder %v710, 1
          %vm743 = vcmp.eq.s32.totalorder %v711, 1
          %vm744 = vcmp.eq.s32.totalorder %v712, 1
          %vm745 = vcmp.eq.s32.totalorder %v713, 1
          %vm746 = vcmp.eq.s32.totalorder %v714, 1
          %vm747 = vcmp.eq.s32.totalorder %v715, 1
          %vm748 = vcmp.eq.s32.totalorder %v716, 1
          %vm749 = vcmp.eq.s32.totalorder %v717, 1
          %vm750 = vcmp.eq.s32.totalorder %v718, 1
          %vm751 = vcmp.eq.s32.totalorder %v719, 1
          %vm752 = vcmp.eq.s32.totalorder %v720, 1
          %vm753 = vcmp.eq.s32.totalorder %v721, 1
          %vm754 = vcmp.eq.s32.totalorder %v722, 1
          %vm755 = vcmp.eq.s32.totalorder %v723, 1
          %vm756 = vcmp.eq.s32.totalorder %v724, 1
          %vm757 = vcmp.eq.s32.totalorder %v725, 1
          %vm758 = vcmp.eq.s32.totalorder %v726, 1
          %vm759 = vcmp.eq.s32.totalorder %v727, 1
          %vm760 = vcmp.eq.s32.totalorder %v728, 1
          %vm761 = vcmp.eq.s32.totalorder %v729, 1
          %vm762 = vcmp.eq.s32.totalorder %v730, 1
          %vm763 = vcmp.eq.s32.totalorder %v731, 1
          %vm764 = vcmp.eq.s32.totalorder %v732, 1
          %vm765 = vcmp.eq.s32.totalorder %v733, 1
          %vm766 = vcmp.eq.s32.totalorder %v734, 1
          %vm767 = vcmp.eq.s32.totalorder %v735, 1
          %vm768 = vcmp.eq.s32.totalorder %v736, 1
          %vm769 = vcmp.eq.s32.totalorder %v737, 1
          %vm770 = vcmp.eq.s32.totalorder %v738, 1
          %vm771 = vcmp.eq.s32.totalorder %v739, 1
          %vm772 = vcmp.eq.s32.totalorder %v740, 1
          %vm773 = vcmp.eq.s32.totalorder %v741, 1
          %v774 = vsel %vm742, %v678, 0.0
          %v775 = vsel %vm743, %v679, 0.0
          %v776 = vsel %vm744, %v680, 0.0
          %v777 = vsel %vm745, %v681, 0.0
          %v778 = vsel %vm746, %v682, 0.0
          %v779 = vsel %vm747, %v683, 0.0
          %v780 = vsel %vm748, %v684, 0.0
          %v781 = vsel %vm749, %v685, 0.0
          %v782 = vsel %vm750, %v686, 0.0
          %v783 = vsel %vm751, %v687, 0.0
          %v784 = vsel %vm752, %v688, 0.0
          %v785 = vsel %vm753, %v689, 0.0
          %v786 = vsel %vm754, %v690, 0.0
          %v787 = vsel %vm755, %v691, 0.0
          %v788 = vsel %vm756, %v692, 0.0
          %v789 = vsel %vm757, %v693, 0.0
          %v790 = vsel %vm758, %v694, 0.0
          %v791 = vsel %vm759, %v695, 0.0
          %v792 = vsel %vm760, %v696, 0.0
          %v793 = vsel %vm761, %v697, 0.0
          %v794 = vsel %vm762, %v698, 0.0
          %v795 = vsel %vm763, %v699, 0.0
          %v796 = vsel %vm764, %v700, 0.0
          %v797 = vsel %vm765, %v701, 0.0
          %v798 = vsel %vm766, %v702, 0.0
          %v799 = vsel %vm767, %v703, 0.0
          %v800 = vsel %vm768, %v704, 0.0
          %v801 = vsel %vm769, %v705, 0.0
          %v802 = vsel %vm770, %v706, 0.0
          %v803 = vsel %vm771, %v707, 0.0
          %v804 = vsel %vm772, %v708, 0.0
          %v805 = vsel %vm773, %v709, 0.0
          %v806 = vld [vmem:[#allocation2] sm:$0x3]
          %vm807 = vcmask 261120
          %v808 = vsel %vm807, %v774, 0.0
          %v809 = vsel %vm807, %v775, 0.0
          %v810 = vadd.f32 %v808, %v809
          %v811 = vsel %vm807, %v776, 0.0
          %v812 = vadd.f32 %v810, %v811
          %v813 = vsel %vm807, %v777, 0.0
          %v814 = vadd.f32 %v812, %v813
          %v815 = vsel %vm807, %v778, 0.0
          %v816 = vadd.f32 %v814, %v815
          %v817 = vsel %vm807, %v779, 0.0
          %v818 = vadd.f32 %v816, %v817
          %v819 = vsel %vm807, %v780, 0.0
          %v820 = vadd.f32 %v818, %v819
          %v821 = vsel %vm807, %v781, 0.0
          %v822 = vadd.f32 %v820, %v821
          %v823 = vsel %vm807, %v782, 0.0
          %v824 = vadd.f32 %v822, %v823
          %v825 = vsel %vm807, %v783, 0.0
          %v826 = vadd.f32 %v824, %v825
          %v827 = vsel %vm807, %v784, 0.0
          %v828 = vadd.f32 %v826, %v827
          %v829 = vsel %vm807, %v785, 0.0
          %v830 = vadd.f32 %v828, %v829
          %v831 = vsel %vm807, %v786, 0.0
          %v832 = vadd.f32 %v830, %v831
          %v833 = vsel %vm807, %v787, 0.0
          %v834 = vadd.f32 %v832, %v833
          %v835 = vsel %vm807, %v788, 0.0
          %v836 = vadd.f32 %v834, %v835
          %v837 = vsel %vm807, %v789, 0.0
          %v838 = vadd.f32 %v836, %v837
          %v839 = vrot.slane %v838, 4
          %v840 = vadd.f32 %v838, %v839
          %v841 = vrot.slane %v840, 2
          %v842 = vadd.f32 %v840, %v841
          %v843 = vrot.slane %v842, 1
          %v844 = vadd.f32 %v842, %v843
          %v845 = vsel %vm807, %v790, 0.0
          %v846 = vsel %vm807, %v791, 0.0
          %v847 = vadd.f32 %v845, %v846
          %v848 = vsel %vm807, %v792, 0.0
          %v849 = vadd.f32 %v847, %v848
          %v850 = vsel %vm807, %v793, 0.0
          %v851 = vadd.f32 %v849, %v850
          %v852 = vsel %vm807, %v794, 0.0
          %v853 = vadd.f32 %v851, %v852
          %v854 = vsel %vm807, %v795, 0.0
          %v855 = vadd.f32 %v853, %v854
          %v856 = vsel %vm807, %v796, 0.0
          %v857 = vadd.f32 %v855, %v856
          %v858 = vsel %vm807, %v797, 0.0
          %v859 = vadd.f32 %v857, %v858
          %v860 = vsel %vm807, %v798, 0.0
          %v861 = vadd.f32 %v859, %v860
          %v862 = vsel %vm807, %v799, 0.0
          %v863 = vadd.f32 %v861, %v862
          %v864 = vsel %vm807, %v800, 0.0
          %v865 = vadd.f32 %v863, %v864
          %v866 = vsel %vm807, %v801, 0.0
          %v867 = vadd.f32 %v865, %v866
          %v868 = vsel %vm807, %v802, 0.0
          %v869 = vadd.f32 %v867, %v868
          %v870 = vsel %vm807, %v803, 0.0
          %v871 = vadd.f32 %v869, %v870
          %v872 = vsel %vm807, %v804, 0.0
          %v873 = vadd.f32 %v871, %v872
          %v874 = vsel %vm807, %v805, 0.0
          %v875 = vadd.f32 %v873, %v874
          %v876 = vrot.slane %v875, 4
          %v877 = vadd.f32 %v875, %v876
          %v878 = vrot.slane %v877, 2
          %v879 = vadd.f32 %v877, %v878
          %v880 = vrot.slane %v879, 1
          %v881 = vadd.f32 %v879, %v880
          %vm884 = vcmask 1041409
          %v885 = vsel %vm884, %v881, %v844
          %v887 = vadd.f32 %v806, %v885
          %vm888 = vcmask 254976
          %889 = vst.msk [vmem:[#allocation2] sm:$0x3] %vm888, %v887
          %v890 = vld [vmem:[#allocation3] sm:$0x3]
          %vm891 = vcmask 1041408
          %v892 = vsel %vm891, %v479, 0.0
          %893 = vadd.xlane.f32.xlu0 %v892
          %v894 = vpop.xlane.xlu0 %893
          %v895 = vadd.f32 %v890, %v894
          %vm896 = vcmask 1024
          %897 = vst.msk [vmem:[#allocation3] sm:$0x3] %vm896, %v895
        $region82: #{tpu_custom_call.1} parent=69 // pred_fallthru
          _
        %p898 = scmp.eq.s32.totalorder %s23, 1
        // Predicated region
        $region83: #{tpu_custom_call.1} parent=69 // pred_check
          %p899 = pneg %p898
        $region84: #{tpu_custom_call.1} parent=69 // pred_check_branch
          %901 = sbr.rel (%p899) target = $region86
        $region85: #{tpu_custom_call.1} parent=69 // pred_region
          %v902 = vld [vmem:[#allocation3] sm:$0x3]
          %v903 = vmax.f32 %v902, 1e-09
          %v904 = vld [vmem:[#allocation2] sm:$0x3]
          %906 = vset.pattern.permute.xlu0 0
          %907 = vperm.xlu0 %906, %v903
          %v908 = vpop.permute.xlu0 %907
          %v910 = vrcp.pop %v908
          %v911 = vmul.f32 %v904, %v910
          %v912 = vld [vmem:[%s3] sm:$0xff]
          %v913 = vld [vmem:[%s3 + $0x8] sm:$0xff]
          %v914 = vld [vmem:[%s3 + $0x10] sm:$0xff]
          %v915 = vld [vmem:[%s3 + $0x18] sm:$0xff]
          %v916 = vld [vmem:[%s4] sm:$0x1]
          %v918 = vlaneseq
          %v919 = vshrl.u32 %v918, 7
          %v920 = vsub.s32 0, %v919
          %v921 = vrot.slane %v916, %v920
          %vm923 = vcmask 261120
          %v925 = vsel %vm923, %v911, 0
          %927 = vmatprep.subr.mxu0 0.0
          %928 = vmatpush1.msra.mxu0 %v912
          %929 = vmatprep.subr.mxu0 0.0
          %930 = vmatpush1.msra.mxu0 %v913
          %931 = vmatprep.subr.mxu0 0.0
          %932 = vmatpush1.msra.mxu0 %v914
          %933 = vmatprep.subr.mxu0 0.0
          %934 = vmatpush1.msra.mxu0 %v915
          %935 = vmatprep.subr.mxu0 0.0
          %936 = vmatpush1.msra.mxu0 0.0
          %937 = vmatprep.subr.mxu0 0.0
          %938 = vmatpush1.msra.mxu0 0.0
          %939 = vmatprep.subr.mxu0 0.0
          %940 = vmatpush1.msra.mxu0 0.0
          %941 = vmatprep.subr.mxu0 0.0
          %942 = vmatpush1.msra.mxu0 0.0
          %943 = vmatprep.subr.mxu0 0.0
          %944 = vmatpush1.msra.mxu0 0.0
          %945 = vmatprep.subr.mxu0 0.0
          %946 = vmatpush1.msra.mxu0 0.0
          %947 = vmatprep.subr.mxu0 0.0
          %948 = vmatpush1.msra.mxu0 0.0
          %949 = vmatprep.subr.mxu0 0.0
          %950 = vmatpush1.msra.mxu0 0.0
          %951 = vmatprep.subr.mxu0 0.0
          %952 = vmatpush1.msra.mxu0 0.0
          %953 = vmatprep.subr.mxu0 0.0
          %954 = vmatpush1.msra.mxu0 0.0
          %955 = vmatprep.subr.mxu0 0.0
          %956 = vmatpush1.msra.mxu0 0.0
          %957 = vmatprep.subr.mxu0 0.0
          %958 = vmatpush1.msra.mxu0 0.0
          %959 = vmatprep.subr.mxu0 0.0
          %960 = vmatpush1.msra.mxu0 0.0
          %961 = vmatprep.subr.mxu0 0.0
          %962 = vmatpush1.msra.mxu0 0.0
          %963 = vmatprep.subr.mxu0 0.0
          %964 = vmatpush1.msra.mxu0 0.0
          %965 = vmatprep.subr.mxu0 0.0
          %966 = vmatpush1.msra.mxu0 0.0
          %967 = vmatprep.subr.mxu0 0.0
          %968 = vmatpush1.msra.mxu0 0.0
          %969 = vmatprep.subr.mxu0 0.0
          %970 = vmatpush1.msra.mxu0 0.0
          %971 = vmatprep.subr.mxu0 0.0
          %972 = vmatpush1.msra.mxu0 0.0
          %973 = vmatprep.subr.mxu0 0.0
          %974 = vmatpush1.msra.mxu0 0.0
          %975 = vmatprep.subr.mxu0 0.0
          %976 = vmatpush1.msra.mxu0 0.0
          %977 = vmatprep.subr.mxu0 0.0
          %978 = vmatpush1.msra.mxu0 0.0
          %979 = vmatprep.subr.mxu0 0.0
          %980 = vmatpush1.msra.mxu0 0.0
          %981 = vmatprep.subr.mxu0 0.0
          %982 = vmatpush1.msra.mxu0 0.0
          %983 = vmatprep.subr.mxu0 0.0
          %984 = vmatpush1.msra.mxu0 0.0
          %985 = vmatprep.subr.mxu0 0.0
          %986 = vmatpush1.msra.mxu0 0.0
          %987 = vmatprep.subr.mxu0 0.0
          %988 = vmatpush1.msra.mxu0 0.0
          %989 = vmatprep.subr.mxu0 0.0
          %990 = vmatpush1.msra.mxu0 0.0
          %991 = vmatprep.mubr.f32.mxu0 0.0
          %992 = vmatmul.mubr.f32.gmra.mrb[0].mxu0 %v925
          %v993 = vpop.f32.mrb[0].mxu0
          %v994 = vadd.f32 %v921, %v993
          %v995 = vpop.f32.mrb[0].mxu0
          %996 = vdwg.mxu0
          %vm997 = vcmask 41984
          %998 = vst.msk [vmem:[#allocation7] sm:$0x3] %vm997, %v994
        $region86: #{tpu_custom_call.1} parent=69 // pred_fallthru
          _
        // Predicated region
        $region87: #{tpu_custom_call.1} parent=69 // pred_check
          %p999 = pneg %p170
        $region88: #{tpu_custom_call.1} parent=69 // pred_check_branch
          %1001 = sbr.rel (%p999) target = $region90
        $region89: #{tpu_custom_call.1} parent=69 // pred_region
          %s1003 = ssub.s32 32, 32
          %1004 = vsyncadd [#allocation8], %s1003
          %s1005 = smul.addr %s22, 32
          %s1006 = scalar_lea.hbm %s5, %s1005
          %s1008 = sshll.u32 [#allocation7], 4
          %s1009 = int_to_ptr.vmem [resolvable:$true] %s1008
          %1011 = dma.vmem_to_hbm [thread:$0]  %s1009, 32, %s1006, [#allocation8]
        $region90: #{tpu_custom_call.1} parent=69 // pred_fallthru
          _
        // Predicated region
        $region91: #{tpu_custom_call.1} parent=69 // pred_check
          %p1012 = pneg %p170
        $region92: #{tpu_custom_call.1} parent=69 // pred_check_branch
          %1014 = sbr.rel (%p1012) target = $region94
        $region93: #{tpu_custom_call.1} parent=69 // pred_region
          %1015 = dma.done [#allocation8], 32
        $region94: #{tpu_custom_call.1} parent=69 // pred_fallthru
          _
      $region70: #{tpu_custom_call.1} parent=5 // pred_fallthru
        _
      %p1016 = scmp.le.s32.totalorder 2, %s13
      // Predicated region
      $region95: #{tpu_custom_call.1} parent=5 // pred_check
        %p1017 = pneg %p1016
      $region96: #{tpu_custom_call.1} parent=5 // pred_check_branch
        %1019 = sbr.rel (%p1017) target = $region98
      $region97: #{tpu_custom_call.1} parent=5 // pred_region
        %s1020 = ssub.s32 %s13, 2
      $region98: #{tpu_custom_call.1} parent=5 // pred_fallthru
        _
    $region6: #{tpu_custom_call.1} parent=1 // loop_footer
      %s17 = sadd.s32 1, %s13
    $region7: #{tpu_custom_call.1} parent=1 // loop_footer_branch
      %12 = sbr.rel target = $region3
    $region8: #{tpu_custom_call.1} parent=1 // loop_exit
      _
    %1021 = vsyncpa [#allocation8], 1
    %s1022 = scalar_lea.sflag [#allocation8], 1
    %1023 = vsyncpa %s1022, 1

</llo_original>
